<compile_context>
chip_gen: v7x
topology: tpu7x:2x2x1
jax: 0.10.0
libtpu: 0.0.40
codegen_flags: <defaults>
</compile_context>

<pallas_src>
import jax
import jax.numpy as jnp
from jax.experimental import pallas as pl
from jax.experimental.pallas import tpu as pltpu


def _round_up(x: int, m: int) -> int:
    return ((x + m - 1) // m) * m


def _pmwl_kernel_single_k(x_ref, w_ref, b_ref, o_ref):
    """Whole K in one tile: one MXU matmul, fused bias + ReLU, no accumulator."""
    acc = jnp.dot(x_ref[...], w_ref[...], preferred_element_type=jnp.float32)
    acc = acc + b_ref[...]                       # bias broadcasts over batch rows
    o_ref[...] = jnp.maximum(acc, 0.0).astype(o_ref.dtype)


def _pmwl_kernel_multi_k(x_ref, w_ref, b_ref, o_ref):
    """K-tiled: accumulate into the resident f32 output block (no scratch)."""
    k = pl.program_id(2)

    @pl.when(k == 0)
    def _init():
        # Seed the accumulator with the broadcast bias -> epilogue is just ReLU.
        o_ref[...] = jnp.broadcast_to(b_ref[...], o_ref.shape).astype(o_ref.dtype)

    o_ref[...] += jnp.dot(x_ref[...], w_ref[...],
                          preferred_element_type=jnp.float32)

    @pl.when(k == pl.num_programs(2) - 1)
    def _epilogue():
        o_ref[...] = jnp.maximum(o_ref[...], 0.0)


def practical_multi_weight_linear(x, color_w, brightness_w, bias):
    """Pallas forward for PracticalMultiWeightLinear.

    Args:
      x:            [batch, in_features] float32
      color_w:      [out_features, in_features] float32
      brightness_w: [out_features, in_features] float32
      bias:         [out_features] float32
    Returns:
      [batch, out_features] in x.dtype
    """
    batch, in_f = x.shape
    out_f = color_w.shape[0]

    # --- tile sizes (bf16 operands; double-buffered ~6-8 MiB, fits every gen).
    tm = min(512, _round_up(batch, 16))       # 16: bf16 sublane packing
    tn = min(512, _round_up(out_f, 128))      # lane-dense output stores
    k_single_cap = 2048                       # 512x2048 bf16 x-tile = 2 MiB
    k128 = _round_up(in_f, 128)
    tk = k128 if k128 <= k_single_cap else 1024

    m_pad = _round_up(batch, tm)
    n_pad = _round_up(out_f, tn)
    k_pad = _round_up(in_f, tk)
    n_k = k_pad // tk

    # --- single fused prep pass per operand: add + transpose + bf16 cast + pad
    #     for the weight, cast + pad for x (XLA fuses each chain into one pass).
    # TODO(synk): for inference with static weights, hoist w_p out of the per-call
    # path entirely (precompute once and reuse).
    w_p = jnp.pad((color_w + brightness_w).T.astype(jnp.bfloat16),
                  ((0, k_pad - in_f), (0, n_pad - out_f)))
    x_p = jnp.pad(x.astype(jnp.bfloat16),
                  ((0, m_pad - batch), (0, k_pad - in_f)))
    b_p = jnp.pad(bias.astype(jnp.float32), (0, n_pad - out_f)).reshape(1, n_pad)

    cost = pl.CostEstimate(
        flops=2 * m_pad * n_pad * k_pad,
        transcendentals=0,
        bytes_accessed=(x_p.size * 2 + w_p.size * 2 + b_p.size * 4
                        + m_pad * n_pad * 4),
    )

    if n_k == 1:
        # --- 2-D grid: no K axis, no accumulator round-trips, no pl.when.
        grid = (m_pad // tm, n_pad // tn)
        out_p = pl.pallas_call(
            _pmwl_kernel_single_k,
            out_shape=jax.ShapeDtypeStruct((m_pad, n_pad), jnp.float32),
            grid_spec=pltpu.PrefetchScalarGridSpec(
                num_scalar_prefetch=0,
                grid=grid,
                in_specs=[
                    pl.BlockSpec((tm, tk), lambda i, j: (i, 0)),   # x tile
                    pl.BlockSpec((tk, tn), lambda i, j: (0, j)),   # summed weight
                    pl.BlockSpec((1, tn), lambda i, j: (0, j)),    # bias
                ],
                out_specs=pl.BlockSpec((tm, tn), lambda i, j: (i, j)),
            ),
            compiler_params=pltpu.CompilerParams(
                dimension_semantics=("parallel", "parallel"),
                vmem_limit_bytes=48 << 20),
            cost_estimate=cost,
        )(x_p, w_p, b_p)
    else:
        # --- 3-D grid: K innermost ("arbitrary"), accumulate into o_ref.
        grid = (m_pad // tm, n_pad // tn, n_k)
        out_p = pl.pallas_call(
            _pmwl_kernel_multi_k,
            out_shape=jax.ShapeDtypeStruct((m_pad, n_pad), jnp.float32),
            grid_spec=pltpu.PrefetchScalarGridSpec(
                num_scalar_prefetch=0,
                grid=grid,
                in_specs=[
                    pl.BlockSpec((tm, tk), lambda i, j, k: (i, k)),   # x tile
                    pl.BlockSpec((tk, tn), lambda i, j, k: (k, j)),   # weight tile
                    pl.BlockSpec((1, tn), lambda i, j, k: (0, j)),    # bias tile
                ],
                out_specs=pl.BlockSpec((tm, tn), lambda i, j, k: (i, j)),
            ),
            compiler_params=pltpu.CompilerParams(
                dimension_semantics=("parallel", "parallel", "arbitrary"),
                vmem_limit_bytes=48 << 20),
            cost_estimate=cost,
        )(x_p, w_p, b_p)

    # Slice off the padded rows / lanes (cheap relative to the GEMM).
    return out_p[:batch, :out_f].astype(x.dtype)


if __name__ == "__main__":
    # Deterministic synthetic parameters (matching nn.Parameter shapes in __init__).
    in_features = 32
    out_features = 16
    batch = 8

    key = jax.random.PRNGKey(0)
    kx, kc, kb = jax.random.split(key, 3)

    x = jax.random.normal(kx, (batch, in_features), dtype=jnp.float32)
    color_w = jax.random.normal(kc, (out_features, in_features), dtype=jnp.float32) * 0.01
    brightness_w = jax.random.normal(kb, (out_features, in_features), dtype=jnp.float32) * 0.01
    bias = jnp.zeros((out_features,), dtype=jnp.float32)

    out = practical_multi_weight_linear(x, color_w, brightness_w, bias)
    out = jax.block_until_ready(out)

    # Reference check in plain JAX (same math as the PyTorch forward).
    # Tolerance loosened for the bf16 operand cast (f32 accumulation retained).
    ref = jnp.maximum(x @ color_w.T + x @ brightness_w.T + bias, 0.0)
    assert out.shape == (batch, out_features)
    assert jnp.allclose(out, ref, atol=2e-2, rtol=2e-2)

    print("KERNEL_OK")
</pallas_src>

<mosaic_0001>
module attributes {stable_mosaic.version = 11 : i64} {
  func.func @_pmwl_kernel_single_k(%arg0: i32, %arg1: i32, %arg2: memref<16x128xbf16, #tpu.memory_space<vmem>>, %arg3: memref<128x128xbf16, #tpu.memory_space<vmem>>, %arg4: memref<1x128xf32, #tpu.memory_space<vmem>>, %arg5: memref<16x128xf32, #tpu.memory_space<vmem>>) attributes {dimension_semantics = [#tpu.dimension_semantics<parallel>, #tpu.dimension_semantics<parallel>], iteration_bounds = array<i64: 1, 1>, scalar_prefetch = 0 : i64, scratch_operands = 0 : i64, tpu.core_type = #tpu.core_type<tc>, window_params = [{transform_indices = @transform_0, window_bounds = array<i64: 16, 128>}, {transform_indices = @transform_1, window_bounds = array<i64: 128, 128>}, {transform_indices = @transform_2, window_bounds = array<i64: 1, 128>}, {transform_indices = @transform_3, window_bounds = array<i64: 16, 128>}]} {
    %c0 = arith.constant 0 : index
    %c0_0 = arith.constant 0 : index
    %0 = vector.load %arg2[%c0, %c0_0] : memref<16x128xbf16, #tpu.memory_space<vmem>>, vector<16x128xbf16>
    %c0_1 = arith.constant 0 : index
    %c0_2 = arith.constant 0 : index
    %1 = vector.load %arg3[%c0_1, %c0_2] : memref<128x128xbf16, #tpu.memory_space<vmem>>, vector<128x128xbf16>
    %cst = arith.constant dense<0.000000e+00> : vector<16x128xf32>
    %2 = tpu.matmul %0, %1, %cst {dimension_numbers = #tpu.dot_dimension_numbers<[1], [0], [0], [1], [0, 0, 1, 1], [], []>} : vector<16x128xbf16>, vector<128x128xbf16>, vector<16x128xf32> -> vector<16x128xf32>
    %c0_3 = arith.constant 0 : index
    %c0_4 = arith.constant 0 : index
    %3 = vector.load %arg4[%c0_3, %c0_4] : memref<1x128xf32, #tpu.memory_space<vmem>>, vector<1x128xf32>
    %4 = vector.broadcast %3 : vector<1x128xf32> to vector<16x128xf32>
    %5 = arith.addf %2, %4 : vector<16x128xf32>
    %cst_5 = arith.constant 0.000000e+00 : f32
    %6 = vector.broadcast %cst_5 : f32 to vector<16x128xf32>
    %7 = arith.maximumf %5, %6 : vector<16x128xf32>
    %c0_6 = arith.constant 0 : index
    %c0_7 = arith.constant 0 : index
    %8 = vector.load %arg5[%c0_6, %c0_7] : memref<16x128xf32, #tpu.memory_space<vmem>>, vector<16x128xf32>
    tpu.vector_store %arg5[%c0_6, %c0_7], %7 {strides = array<i32>} : memref<16x128xf32, #tpu.memory_space<vmem>>, vector<16x128xf32>,
    return
  }
  func.func @transform_0(%arg0: i32, %arg1: i32) -> (i32, i32) {
    %c0_i32 = arith.constant 0 : i32
    %c0_i32_0 = arith.constant 0 : i32
    return %arg0, %c0_i32 : i32, i32
  }
  func.func @transform_1(%arg0: i32, %arg1: i32) -> (i32, i32) {
    %c0_i32 = arith.constant 0 : i32
    %c0_i32_0 = arith.constant 0 : i32
    return %c0_i32, %arg1 : i32, i32
  }
  func.func @transform_2(%arg0: i32, %arg1: i32) -> (i32, i32) {
    %c0_i32 = arith.constant 0 : i32
    %c0_i32_0 = arith.constant 0 : i32
    return %c0_i32, %arg1 : i32, i32
  }
  func.func @transform_3(%arg0: i32, %arg1: i32) -> (i32, i32) {
    %c0_i32 = arith.constant 0 : i32
    return %arg0, %arg1 : i32, i32
  }
}

</mosaic_0001>

<llo_original>
// kernel: tpu_custom_call.1
$region0: #{tpu_custom_call.1}
  #allocation0 [shape = 'u32[]', space=smem, size = 0x4, offset = 0x4, fixed_abs, tag = 'smem constant byte address 0x4 - core index']
  #allocation1 [shape = 'u32[144,128]{1,0:T(1,128)}', space=vmem, size = 0x12000, scoped, tag = 'internal scratch']
  %s0 = inlined_call_operand.hbm [shape: bf16[16,128], index: 0, kind: input, shape index: {}]
  %s1 = inlined_call_operand.hbm [shape: bf16[128,128], index: 1, kind: input, shape index: {}]
  %s2 = inlined_call_operand.vmem [shape: f32[1,128], index: 2, kind: input, shape index: {}]
  %s3 = inlined_call_operand.hbm [shape: f32[16,128], index: 3, kind: output, shape index: {}]
  %s4 = sld [smem:[#allocation0]]
  $region30: #{tpu_custom_call.1} parent=0
    _
  %s6 = ssub.s32 1, %s4
  %s7 = scalar_select 0, %s6, %s4
  $region1: #{tpu_custom_call.1} parent=0
    #allocation2 [shape = 'u8[4096]{0}', space=vmem, size = 0x1000, scoped, tag = 'input window, operand 0, single buffered']
    #allocation3 [shape = 's32[1]{0}', space=sflag, size = 0x4, scoped, tag = 'scoped memory for tpu_custom_call.1']
    #allocation4 [shape = 's32[1]{0}', space=sflag, size = 0x4, scoped, tag = 'scoped memory for tpu_custom_call.1']
    #allocation5 [shape = 'u8[32768]{0}', space=vmem, size = 0x8000, scoped, tag = 'input window, operand 1, single buffered']
    #allocation6 [shape = 's32[1]{0}', space=sflag, size = 0x4, scoped, tag = 'scoped memory for tpu_custom_call.1']
    #allocation7 [shape = 'u8[8192]{0}', space=vmem, size = 0x2000, scoped, tag = 'output window, operand 0, single buffered']
    %8 = vsyncpa [#allocation3], 0
    %9 = vsyncpa [#allocation6], 0
    %10 = vsyncpa [#allocation4], 0
    // Predicated region
    $region2: #{tpu_custom_call.1} parent=1 // pred_check
      _
    $region3: #{tpu_custom_call.1} parent=1 // pred_check_branch
      %12 = sbr.rel (0) target = $region5
    $region4: #{tpu_custom_call.1} parent=1 // pred_region
      %s14 = ssub.s32 128, 128
      %15 = vsyncadd [#allocation3], %s14
      %s16 = sshll.u32 [#allocation2], 4
      %s17 = int_to_ptr.vmem [resolvable:$true] %s16
      %22 = dma.hbm_to_vmem [thread:$0]  %s0, 128, %s17, [#allocation3], 64, 64, 4
    $region5: #{tpu_custom_call.1} parent=1 // pred_fallthru
      _
    // Predicated region
    $region6: #{tpu_custom_call.1} parent=1 // pred_check
      _
    $region7: #{tpu_custom_call.1} parent=1 // pred_check_branch
      %24 = sbr.rel (0) target = $region9
    $region8: #{tpu_custom_call.1} parent=1 // pred_region
      %s26 = ssub.s32 1024, 1024
      %27 = vsyncadd [#allocation6], %s26
      %s28 = sshll.u32 [#allocation5], 4
      %s29 = int_to_ptr.vmem [resolvable:$true] %s28
      %34 = dma.hbm_to_vmem [thread:$0]  %s1, 1024, %s29, [#allocation6], 64, 64, 4
    $region9: #{tpu_custom_call.1} parent=1 // pred_fallthru
      _
    // Predicated region
    $region10: #{tpu_custom_call.1} parent=1 // pred_check
      _
    $region11: #{tpu_custom_call.1} parent=1 // pred_check_branch
      %36 = sbr.rel (0) target = $region13
    $region12: #{tpu_custom_call.1} parent=1 // pred_region
      _
    $region13: #{tpu_custom_call.1} parent=1 // pred_fallthru
      _
    // Predicated region
    $region14: #{tpu_custom_call.1} parent=1 // pred_check
      _
    $region15: #{tpu_custom_call.1} parent=1 // pred_check_branch
      %38 = sbr.rel (0) target = $region17
    $region16: #{tpu_custom_call.1} parent=1 // pred_region
      %39 = dma.done [#allocation3], 128
    $region17: #{tpu_custom_call.1} parent=1 // pred_fallthru
      _
    // Predicated region
    $region18: #{tpu_custom_call.1} parent=1 // pred_check
      _
    $region19: #{tpu_custom_call.1} parent=1 // pred_check_branch
      %41 = sbr.rel (0) target = $region21
    $region20: #{tpu_custom_call.1} parent=1 // pred_region
      %42 = dma.done [#allocation6], 1024
    $region21: #{tpu_custom_call.1} parent=1 // pred_fallthru
      _
    %v44 = vld [vmem:[#allocation2] sm:$0xf]
    %v45 = vld [vmem:[#allocation2 + $0x4] sm:$0xf]
    %v46 = vld [vmem:[#allocation5] sm:$0xf]
    %v47 = vld [vmem:[#allocation5 + $0x4] sm:$0xf]
    %v48 = vld [vmem:[#allocation5 + $0x8] sm:$0xf]
    %v49 = vld [vmem:[#allocation5 + $0xc] sm:$0xf]
    %v50 = vld [vmem:[#allocation5 + $0x10] sm:$0xf]
    %v51 = vld [vmem:[#allocation5 + $0x14] sm:$0xf]
    %v52 = vld [vmem:[#allocation5 + $0x18] sm:$0xf]
    %v53 = vld [vmem:[#allocation5 + $0x1c] sm:$0xf]
    %v54 = vld [vmem:[#allocation5 + $0x20] sm:$0xf]
    %v55 = vld [vmem:[#allocation5 + $0x24] sm:$0xf]
    %v56 = vld [vmem:[#allocation5 + $0x28] sm:$0xf]
    %v57 = vld [vmem:[#allocation5 + $0x2c] sm:$0xf]
    %v58 = vld [vmem:[#allocation5 + $0x30] sm:$0xf]
    %v59 = vld [vmem:[#allocation5 + $0x34] sm:$0xf]
    %v60 = vld [vmem:[#allocation5 + $0x38] sm:$0xf]
    %v61 = vld [vmem:[#allocation5 + $0x3c] sm:$0xf]
    %v62 = vld [vmem:[%s2] sm:$0x1]
    %v64 = vlaneseq
    %v65 = vshrl.u32 %v64, 7
    %v66 = vsub.s32 0, %v65
    %v67 = vrot.slane %v62, %v66
    %v71 = vunpack.c.l.b16 %v44
    %v72 = vunpack.c.l.b16 %v45
    %v73 = vpack.c.b16 %v72, %v71
    %v91 = vunpack.c.l.b16 %v46
    %v92 = vunpack.c.l.b16 %v47
    %v93 = vunpack.c.l.b16 %v48
    %v94 = vunpack.c.l.b16 %v49
    %v95 = vunpack.c.l.b16 %v50
    %v96 = vunpack.c.l.b16 %v51
    %v97 = vunpack.c.l.b16 %v52
    %v98 = vunpack.c.l.b16 %v53
    %v99 = vunpack.c.l.b16 %v54
    %v100 = vunpack.c.l.b16 %v55
    %v101 = vunpack.c.l.b16 %v56
    %v102 = vunpack.c.l.b16 %v57
    %v103 = vunpack.c.l.b16 %v58
    %v104 = vunpack.c.l.b16 %v59
    %v105 = vunpack.c.l.b16 %v60
    %v106 = vunpack.c.l.b16 %v61
    %v107 = vpack.c.b16 %v92, %v91
    %v108 = vpack.c.b16 %v94, %v93
    %v109 = vpack.c.b16 %v96, %v95
    %v110 = vpack.c.b16 %v98, %v97
    %v111 = vpack.c.b16 %v100, %v99
    %v112 = vpack.c.b16 %v102, %v101
    %v113 = vpack.c.b16 %v104, %v103
    %v114 = vpack.c.b16 %v106, %v105
    %123 = vmatprep.subr.bf16.mxu0 0
    %124 = vmatpush1.bf16.msra.mxu0 %v107
    %125 = vmatprep.subr.bf16.mxu0 0
    %126 = vmatpush1.bf16.msra.mxu0 %v108
    %127 = vmatprep.subr.bf16.mxu0 0
    %128 = vmatpush1.bf16.msra.mxu0 %v109
    %129 = vmatprep.subr.bf16.mxu0 0
    %130 = vmatpush1.bf16.msra.mxu0 %v110
    %131 = vmatprep.subr.bf16.mxu0 0
    %132 = vmatpush1.bf16.msra.mxu0 %v111
    %133 = vmatprep.subr.bf16.mxu0 0
    %134 = vmatpush1.bf16.msra.mxu0 %v112
    %135 = vmatprep.subr.bf16.mxu0 0
    %136 = vmatpush1.bf16.msra.mxu0 %v113
    %137 = vmatprep.subr.bf16.mxu0 0
    %138 = vmatpush1.bf16.msra.mxu0 %v114
    %139 = vmatprep.subr.bf16.mxu0 0
    %140 = vmatpush1.bf16.msra.mxu0 0
    %141 = vmatprep.subr.bf16.mxu0 0
    %142 = vmatpush1.bf16.msra.mxu0 0
    %143 = vmatprep.subr.bf16.mxu0 0
    %144 = vmatpush1.bf16.msra.mxu0 0
    %145 = vmatprep.subr.bf16.mxu0 0
    %146 = vmatpush1.bf16.msra.mxu0 0
    %147 = vmatprep.subr.bf16.mxu0 0
    %148 = vmatpush1.bf16.msra.mxu0 0
    %149 = vmatprep.subr.bf16.mxu0 0
    %150 = vmatpush1.bf16.msra.mxu0 0
    %151 = vmatprep.subr.bf16.mxu0 0
    %152 = vmatpush1.bf16.msra.mxu0 0
    %153 = vmatprep.subr.bf16.mxu0 0
    %154 = vmatpush1.bf16.msra.mxu0 0
    %155 = vmatprep.mubr.bf16.mxu0 0
    %156 = vmatmul.mubr.bf16.gmra.mrb[0].mxu0 %v73
    %v157 = vpop.f32.mrb[0].mxu0
    %v158 = vadd.f32 %v67, %v157
    %v159 = vpop.f32.mrb[0].mxu0
    %v160 = vpop.f32.mrb[0].mxu0
    %v161 = vadd.f32 %v67, %v160
    %v162 = vpop.f32.mrb[0].mxu0
    %163 = vdwg.mxu0
    %v164 = vmax.f32 %v158, 0.0
    %v165 = vmax.f32 %v161, 0.0
    %166 = vst [vmem:[#allocation7] sm:$0xff] %v164
    %167 = vst [vmem:[#allocation7 + $0x8] sm:$0xff] %v165
    // Predicated region
    $region22: #{tpu_custom_call.1} parent=1 // pred_check
      _
    $region23: #{tpu_custom_call.1} parent=1 // pred_check_branch
      %169 = sbr.rel (0) target = $region25
    $region24: #{tpu_custom_call.1} parent=1 // pred_region
      %s171 = ssub.s32 256, 256
      %172 = vsyncadd [#allocation4], %s171
      %s173 = sshll.u32 [#allocation7], 4
      %s174 = int_to_ptr.vmem [resolvable:$true] %s173
      %179 = dma.vmem_to_hbm [thread:$0]  %s174, 256, %s3, [#allocation4], 128, 128, 8
    $region25: #{tpu_custom_call.1} parent=1 // pred_fallthru
      _
    // Predicated region
    $region26: #{tpu_custom_call.1} parent=1 // pred_check
      _
    $region27: #{tpu_custom_call.1} parent=1 // pred_check_branch
      %181 = sbr.rel (0) target = $region29
    $region28: #{tpu_custom_call.1} parent=1 // pred_region
      %182 = dma.done [#allocation4], 256
    $region29: #{tpu_custom_call.1} parent=1 // pred_fallthru
      _
    %183 = vsyncpa [#allocation3], 1
    %184 = vsyncpa [#allocation6], 1
    %185 = vsyncpa [#allocation4], 1

</llo_original>
